<compile_context>
chip_gen: v7x
topology: tpu7x:2x2x1
jax: 0.10.0
libtpu: 0.0.40
codegen_flags: <defaults>
</compile_context>

<pallas_src>
import math

import jax
import jax.numpy as jnp
from jax.experimental import pallas as pl
from jax.experimental.pallas import tpu as pltpu


# ---------------------------------------------------------------------------
# Tile / VMEM policy
# ---------------------------------------------------------------------------
def _seq_tile(n, target):
    """Largest tile <= target that divides n and is a multiple of 16 (bf16
    sublane packing); otherwise use the full extent."""
    if n <= target:
        return n
    for step in (128, 16):
        t = (target // step) * step
        while t >= step:
            if n % t == 0:
                return t
            t -= step
    return n


def _tpu_kernel_policy():
    """Pick tile targets and an explicit scoped-VMEM limit per generation."""
    block_m, block_q, block_k = 512, 256, 256
    vmem_limit = None
    try:
        cap = int(pltpu.get_tpu_info().vmem_capacity_bytes)
    except Exception:
        cap = None
    if cap is not None:
        if cap <= (64 << 20):          # v7x-class: 64 MiB physical VMEM
            block_q = 128              # shrink s/p (h,tq,tk) f32 temporaries
            vmem_limit = min((3 * cap) // 4, cap - (8 << 20))
        else:                          # v5e / v6e: 128 MiB physical VMEM
            vmem_limit = 96 << 20      # raise the 16/32 MiB scoped default
    try:
        kind = jax.devices()[0].device_kind.lower()
        if "v5 lite" in kind or "v5e" in kind:
            block_q, block_k = 128, 128    # 128-wide MXU face on v5e
    except Exception:
        pass
    return block_m, block_q, block_k, vmem_limit


# ---------------------------------------------------------------------------
# Kernel 1: linear projection emitted directly in (batch, h, n, d_k) layout.
# ---------------------------------------------------------------------------
def _make_proj_kernel(num_heads):
    def kernel(x_ref, w_ref, b_ref, o_ref):
        # x_ref: (1, bn, d_embed)   w_ref: (h, d_embed, d_k)
        # b_ref: (h, 1, d_k)        o_ref: (1, h, bn, d_k)
        x = x_ref[0]
        for head in range(num_heads):      # each result stored immediately
            y = jnp.dot(x, w_ref[head], preferred_element_type=jnp.float32)
            o_ref[0, head] = (y + b_ref[head]).astype(o_ref.dtype)
    return kernel


def _head_projection(x, w_heads, b_heads, *, block_m, vmem_limit):
    batch, n, d_embed = x.shape
    h, _, d_k = w_heads.shape
    bn = _seq_tile(n, block_m)

    return pl.pallas_call(
        _make_proj_kernel(h),
        out_shape=jax.ShapeDtypeStruct((batch, h, n, d_k), x.dtype),
        grid=(batch, n // bn),
        in_specs=[
            pl.BlockSpec((1, bn, d_embed), lambda b, i: (b, i, 0)),
            pl.BlockSpec((h, d_embed, d_k), lambda b, i: (0, 0, 0)),
            pl.BlockSpec((h, 1, d_k), lambda b, i: (0, 0, 0)),
        ],
        out_specs=pl.BlockSpec((1, h, bn, d_k), lambda b, i: (b, 0, i, 0)),
        compiler_params=pltpu.CompilerParams(
            dimension_semantics=("parallel", "parallel"),
            vmem_limit_bytes=vmem_limit),
    )(x, w_heads, b_heads)


# ---------------------------------------------------------------------------
# Kernel 2: flash-style attention (online softmax), additive mask bias,
#           context output in (batch, h, n, d_k) layout.
# ---------------------------------------------------------------------------
def _make_attn_kernel(masked, compute_dtype):
    def kernel(*refs):
        if masked:
            (q_ref, k_ref, v_ref, bias_ref, o_ref,
             m_scr, l_scr, acc_scr) = refs
        else:
            (q_ref, k_ref, v_ref, o_ref, m_scr, l_scr, acc_scr) = refs
            bias_ref = None

        ki = pl.program_id(2)

        @pl.when(ki == 0)
        def _init():
            m_scr[...] = jnp.full(m_scr.shape, -jnp.inf, jnp.float32)
            l_scr[...] = jnp.zeros(l_scr.shape, jnp.float32)
            acc_scr[...] = jnp.zeros(acc_scr.shape, jnp.float32)

        q = q_ref[0]           # (h, tq, d_k); 1/sqrt(d_k) folded into Wq
        k = k_ref[0]           # (h, tk, d_k)
        v = v_ref[0]           # (h, tk, d_k)

        # Heads batched into a single MXU contraction (no per-head slicing).
        s = jnp.einsum("hqd,hkd->hqk", q, k,
                       preferred_element_type=jnp.float32)   # (h, tq, tk) f32
        if masked:
            # Additive bias (0 / -1e11): single add, no compare+select.
            s = s + bias_ref[0].astype(jnp.float32)[None, :, :]

        m_prev = m_scr[...]
        m_new = jnp.maximum(m_prev, jnp.max(s, axis=-1, keepdims=True))
        alpha = jnp.exp(m_prev - m_new)
        p = jnp.exp(s - m_new)
        l_scr[...] = alpha * l_scr[...] + jnp.sum(p, axis=-1, keepdims=True)
        acc_scr[...] = alpha * acc_scr[...] + jnp.einsum(
            "hqk,hkd->hqd", p.astype(compute_dtype), v,
            preferred_element_type=jnp.float32)
        m_scr[...] = m_new

        @pl.when(ki == pl.num_programs(2) - 1)
        def _finalize():
            inv_l = pl.reciprocal(l_scr[...], approx=True)   # EUP, bf16 output
            o_ref[0] = (acc_scr[...] * inv_l).astype(o_ref.dtype)

        # TODO(synk): nn.Dropout on attention probs is identity in eval mode.
        # TODO(synk): mask is a runtime tensor, so causal-tile skipping /
        # in-kernel iota mask generation is not applied for the general case.

    return kernel


def _flash_attention(q4, k4, v4, mask_bias, *, block_q, block_k, vmem_limit):
    batch, h, n, d_k = q4.shape
    tq = _seq_tile(n, block_q)
    tk = _seq_tile(n, block_k)
    compute_dtype = q4.dtype
    masked = mask_bias is not None

    q_spec = pl.BlockSpec((1, h, tq, d_k), lambda b, qi, ki: (b, 0, qi, 0))
    kv_spec = pl.BlockSpec((1, h, tk, d_k), lambda b, qi, ki: (b, 0, ki, 0))
    in_specs = [q_spec, kv_spec, kv_spec]
    inputs = [q4, k4, v4]
    if masked:
        if mask_bias.shape[0] > 1:
            mmap = lambda b, qi, ki: (b, qi, ki)
        else:  # shared mask: never broadcast/stream per batch element
            mmap = lambda b, qi, ki: (0, qi, ki)
        in_specs.append(pl.BlockSpec((1, tq, tk), mmap))
        inputs.append(mask_bias)

    kernel = _make_attn_kernel(masked, compute_dtype)
    return pl.pallas_call(
        kernel,
        out_shape=jax.ShapeDtypeStruct((batch, h, n, d_k), compute_dtype),
        grid=(batch, n // tq, n // tk),
        in_specs=in_specs,
        out_specs=pl.BlockSpec((1, h, tq, d_k), lambda b, qi, ki: (b, 0, qi, 0)),
        scratch_shapes=[
            pltpu.VMEM((h, tq, 1), jnp.float32),     # running max
            pltpu.VMEM((h, tq, 1), jnp.float32),     # running denominator
            pltpu.VMEM((h, tq, d_k), jnp.float32),   # context accumulator
        ],
        compiler_params=pltpu.CompilerParams(
            dimension_semantics=("parallel", "parallel", "arbitrary"),
            vmem_limit_bytes=vmem_limit),
    )(*inputs)


# ---------------------------------------------------------------------------
# Kernel 3: output projection, head axis as the (last) reduction axis so only
#           one (d_k, d_model) Wo slab is VMEM-resident per step.
# ---------------------------------------------------------------------------
def _out_proj_kernel(ctx_ref, wo_ref, bo_ref, o_ref, acc_ref):
    hh = pl.program_id(2)

    @pl.when(hh == 0)
    def _init():
        acc_ref[...] = jnp.zeros_like(acc_ref)

    # sum_h ctx_h @ Wo_h == concat(ctx) @ Wo  (per-head leading-dim slabs only)
    acc_ref[...] += jnp.dot(ctx_ref[0, 0], wo_ref[0],
                            preferred_element_type=jnp.float32)

    @pl.when(hh == pl.num_programs(2) - 1)
    def _finalize():
        o_ref[0] = (acc_ref[...] + bo_ref[...]).astype(o_ref.dtype)


def _output_projection(ctx4, wo3, bo, *, out_dtype, block_m, vmem_limit):
    batch, h, n, d_k = ctx4.shape
    d_model = wo3.shape[2]
    bn = _seq_tile(n, block_m)

    return pl.pallas_call(
        _out_proj_kernel,
        out_shape=jax.ShapeDtypeStruct((batch, n, d_model), out_dtype),
        grid=(batch, n // bn, h),
        in_specs=[
            pl.BlockSpec((1, 1, bn, d_k), lambda b, i, hh: (b, hh, i, 0)),
            pl.BlockSpec((1, d_k, d_model), lambda b, i, hh: (hh, 0, 0)),
            pl.BlockSpec((1, d_model), lambda b, i, hh: (0, 0)),
        ],
        out_specs=pl.BlockSpec((1, bn, d_model), lambda b, i, hh: (b, i, 0)),
        scratch_shapes=[pltpu.VMEM((bn, d_model), jnp.float32)],
        compiler_params=pltpu.CompilerParams(
            dimension_semantics=("parallel", "parallel", "arbitrary"),
            vmem_limit_bytes=vmem_limit),
    )(ctx4, wo3, bo)


# ---------------------------------------------------------------------------
# Wrapper reproducing MultiHeadAttentionLayer.forward (eval mode).
# ---------------------------------------------------------------------------
def multi_head_attention(query, key, value, params, mask=None, *, h,
                         compute_dtype=jnp.bfloat16):
    batch, n, d_embed = query.shape
    d_model = params["wq"].shape[1]
    assert d_model % h == 0
    d_k = d_model // h
    out_dtype = query.dtype

    block_m, block_q, block_k, vmem_limit = _tpu_kernel_policy()

    scale = 1.0 / math.sqrt(d_k)

    # Head-major parameter layouts (host-side, tiny, one-time); 1/sqrt(d_k)
    # folded into the Q projection so the attention kernel does no scaling.
    def head_w(w):
        return w.reshape(d_embed, h, d_k).transpose(1, 0, 2).astype(compute_dtype)

    def head_b(b):
        return b.reshape(h, 1, d_k).astype(jnp.float32)

    wq_h = head_w(params["wq"] * scale)
    bq_h = head_b(params["bq"] * scale)
    wk_h, bk_h = head_w(params["wk"]), head_b(params["bk"])
    wv_h, bv_h = head_w(params["wv"]), head_b(params["bv"])
    wo3 = params["wo"].reshape(h, d_k, d_model).astype(compute_dtype)
    bo = params["bo"].astype(jnp.float32)

    xq = query.astype(compute_dtype)
    xk = key.astype(compute_dtype)
    xv = value.astype(compute_dtype)

    # Q/K/V projections straight into (batch, h, n, d_k) — no host transpose,
    # only one projection weight resident at a time.
    q4 = _head_projection(xq, wq_h, bq_h, block_m=block_m, vmem_limit=vmem_limit)
    k4 = _head_projection(xk, wk_h, bk_h, block_m=block_m, vmem_limit=vmem_limit)
    v4 = _head_projection(xv, wv_h, bv_h, block_m=block_m, vmem_limit=vmem_limit)

    mask_bias = None
    if mask is not None:
        mask = jnp.asarray(mask)
        if mask.ndim == 2:
            mask = mask[None]
        assert mask.ndim == 3 and mask.shape[-2:] == (n, n)
        # "mask == 0 => masked" semantics as additive bf16 bias (0 / -1e11).
        mask_bias = jnp.where(mask != 0, 0.0, -1e11).astype(jnp.bfloat16)

    ctx4 = _flash_attention(q4, k4, v4, mask_bias,
                            block_q=block_q, block_k=block_k,
                            vmem_limit=vmem_limit)

    return _output_projection(ctx4, wo3, bo, out_dtype=out_dtype,
                              block_m=min(block_m, 256), vmem_limit=vmem_limit)


# ---------------------------------------------------------------------------
# Pure-JAX reference mirroring the PyTorch forward (eval mode) with the same
# mixed-precision policy (bf16 MXU inputs, f32 accumulation).
# ---------------------------------------------------------------------------
def _reference(query, key, value, params, mask, h, compute_dtype):
    batch, n, _ = query.shape
    d_model = params["wq"].shape[1]
    d_k = d_model // h
    scale = 1.0 / math.sqrt(d_k)
    cd = compute_dtype

    def proj(x, w, b):
        y = jnp.dot(x.astype(cd), w.astype(cd),
                    preferred_element_type=jnp.float32) + b
        return y.astype(cd).reshape(batch, n, h, d_k).transpose(0, 2, 1, 3)

    q = proj(query, params["wq"] * scale, params["bq"] * scale)
    k = proj(key, params["wk"], params["bk"])
    v = proj(value, params["wv"], params["bv"])

    s = jnp.einsum("bhqd,bhkd->bhqk", q, k, preferred_element_type=jnp.float32)
    if mask is not None:
        s = jnp.where(mask[:, None, :, :] != 0, s, jnp.float32(-1e11))
    p = jax.nn.softmax(s, axis=-1)
    ctx = jnp.einsum("bhqk,bhkd->bhqd", p.astype(cd), v,
                     preferred_element_type=jnp.float32)
    ctx = ctx.transpose(0, 2, 1, 3).reshape(batch, n, d_model).astype(cd)
    return jnp.dot(ctx, params["wo"].astype(cd),
                   preferred_element_type=jnp.float32) + params["bo"]


if __name__ == "__main__":
    # Small, TPU-friendly shapes: batch=2, seq=8, d_embed=64, d_model=128, h=4.
    batch, n, d_embed, d_model, h = 2, 8, 64, 128, 4

    key0 = jax.random.PRNGKey(0)
    ks = jax.random.split(key0, 11)
    s_in = 1.0 / math.sqrt(d_embed)
    s_dm = 1.0 / math.sqrt(d_model)

    params = {
        "wq": jax.random.normal(ks[0], (d_embed, d_model), jnp.float32) * s_in,
        "bq": jax.random.normal(ks[1], (1, d_model), jnp.float32) * 0.5,
        "wk": jax.random.normal(ks[2], (d_embed, d_model), jnp.float32) * s_in,
        "bk": jax.random.normal(ks[3], (1, d_model), jnp.float32) * 0.5,
        "wv": jax.random.normal(ks[4], (d_embed, d_model), jnp.float32) * s_in,
        "bv": jax.random.normal(ks[5], (1, d_model), jnp.float32) * 0.5,
        "wo": jax.random.normal(ks[6], (d_model, d_model), jnp.float32) * s_dm,
        "bo": jax.random.normal(ks[7], (1, d_model), jnp.float32) * 0.5,
    }

    query = jax.random.normal(ks[8], (batch, n, d_embed), jnp.float32)
    key_in = jax.random.normal(ks[9], (batch, n, d_embed), jnp.float32)
    value = jax.random.normal(ks[10], (batch, n, d_embed), jnp.float32)
    # Shared causal mask (batch dim 1) — exercises the masked_fill path without
    # streaming a dense per-batch mask.
    mask = jnp.tril(jnp.ones((1, n, n), jnp.float32))

    out = multi_head_attention(query, key_in, value, params, mask=mask, h=h)
    out = jax.block_until_ready(out)

    ref = _reference(query, key_in, value, params, mask, h, jnp.bfloat16)
    assert out.shape == (batch, n, d_model)
    # Tolerance sized for bf16 MXU inputs (f32 accumulation) + approx reciprocal.
    assert jnp.allclose(out, ref, atol=5e-2, rtol=5e-2), "mismatch vs reference"

    print("KERNEL_OK")
</pallas_src>

<mosaic_0001>
module attributes {stable_mosaic.version = 11 : i64} {
  func.func @kernel(%arg0: i32, %arg1: i32, %arg2: memref<1x8x64xbf16, #tpu.memory_space<vmem>>, %arg3: memref<4x64x32xbf16, #tpu.memory_space<vmem>>, %arg4: memref<4x1x32xf32, #tpu.memory_space<vmem>>, %arg5: memref<1x4x8x32xbf16, #tpu.memory_space<vmem>>) attributes {dimension_semantics = [#tpu.dimension_semantics<parallel>, #tpu.dimension_semantics<parallel>], iteration_bounds = array<i64: 2, 1>, scalar_prefetch = 0 : i64, scratch_operands = 0 : i64, tpu.core_type = #tpu.core_type<tc>, window_params = [{transform_indices = @transform_0, window_bounds = array<i64: 1, 8, 64>}, {pipeline_mode = #tpu.pipeline_mode<synchronous>, transform_indices = @transform_1, window_bounds = array<i64: 4, 64, 32>}, {pipeline_mode = #tpu.pipeline_mode<synchronous>, transform_indices = @transform_2, window_bounds = array<i64: 4, 1, 32>}, {transform_indices = @transform_3, window_bounds = array<i64: 1, 4, 8, 32>}]} {
    %c0 = arith.constant 0 : index
    %c0_0 = arith.constant 0 : index
    %c0_1 = arith.constant 0 : index
    %0 = vector.load %arg2[%c0, %c0_0, %c0_1] : memref<1x8x64xbf16, #tpu.memory_space<vmem>>, vector<1x8x64xbf16>
    %1 = vector.shape_cast %0 : vector<1x8x64xbf16> to vector<8x64xbf16>
    %c0_2 = arith.constant 0 : index
    %c0_3 = arith.constant 0 : index
    %c0_4 = arith.constant 0 : index
    %2 = vector.load %arg3[%c0_2, %c0_3, %c0_4] : memref<4x64x32xbf16, #tpu.memory_space<vmem>>, vector<1x64x32xbf16>
    %3 = vector.shape_cast %2 : vector<1x64x32xbf16> to vector<64x32xbf16>
    %cst = arith.constant dense<0.000000e+00> : vector<8x32xf32>
    %4 = tpu.matmul %1, %3, %cst {dimension_numbers = #tpu.dot_dimension_numbers<[1], [0], [0], [1], [0, 0, 1, 1], [], []>} : vector<8x64xbf16>, vector<64x32xbf16>, vector<8x32xf32> -> vector<8x32xf32>
    %c0_5 = arith.constant 0 : index
    %c0_6 = arith.constant 0 : index
    %c0_7 = arith.constant 0 : index
    %5 = vector.load %arg4[%c0_5, %c0_6, %c0_7] : memref<4x1x32xf32, #tpu.memory_space<vmem>>, vector<1x1x32xf32>
    %6 = vector.shape_cast %5 : vector<1x1x32xf32> to vector<1x32xf32>
    %7 = vector.broadcast %6 : vector<1x32xf32> to vector<8x32xf32>
    %8 = arith.addf %4, %7 : vector<8x32xf32>
    %9 = arith.truncf %8 : vector<8x32xf32> to vector<8x32xbf16>
    %c0_8 = arith.constant 0 : index
    %c0_9 = arith.constant 0 : index
    %c0_10 = arith.constant 0 : index
    %c0_11 = arith.constant 0 : index
    %10 = vector.load %arg5[%c0_8, %c0_9, %c0_10, %c0_11] : memref<1x4x8x32xbf16, #tpu.memory_space<vmem>>, vector<1x1x8x32xbf16>
    %11 = vector.shape_cast %10 : vector<1x1x8x32xbf16> to vector<8x32xbf16>
    %12 = vector.shape_cast %9 : vector<8x32xbf16> to vector<1x1x8x32xbf16>
    tpu.vector_store %arg5[%c0_8, %c0_9, %c0_10, %c0_11], %12 {strides = array<i32>} : memref<1x4x8x32xbf16, #tpu.memory_space<vmem>>, vector<1x1x8x32xbf16>,
    %c1 = arith.constant 1 : index
    %c0_12 = arith.constant 0 : index
    %c0_13 = arith.constant 0 : index
    %13 = vector.load %arg3[%c1, %c0_12, %c0_13] : memref<4x64x32xbf16, #tpu.memory_space<vmem>>, vector<1x64x32xbf16>
    %14 = vector.shape_cast %13 : vector<1x64x32xbf16> to vector<64x32xbf16>
    %cst_14 = arith.constant dense<0.000000e+00> : vector<8x32xf32>
    %15 = tpu.matmul %1, %14, %cst_14 {dimension_numbers = #tpu.dot_dimension_numbers<[1], [0], [0], [1], [0, 0, 1, 1], [], []>} : vector<8x64xbf16>, vector<64x32xbf16>, vector<8x32xf32> -> vector<8x32xf32>
    %c1_15 = arith.constant 1 : index
    %c0_16 = arith.constant 0 : index
    %c0_17 = arith.constant 0 : index
    %16 = vector.load %arg4[%c1_15, %c0_16, %c0_17] : memref<4x1x32xf32, #tpu.memory_space<vmem>>, vector<1x1x32xf32>
    %17 = vector.shape_cast %16 : vector<1x1x32xf32> to vector<1x32xf32>
    %18 = vector.broadcast %17 : vector<1x32xf32> to vector<8x32xf32>
    %19 = arith.addf %15, %18 : vector<8x32xf32>
    %20 = arith.truncf %19 : vector<8x32xf32> to vector<8x32xbf16>
    %c0_18 = arith.constant 0 : index
    %c1_19 = arith.constant 1 : index
    %c0_20 = arith.constant 0 : index
    %c0_21 = arith.constant 0 : index
    %21 = vector.load %arg5[%c0_18, %c1_19, %c0_20, %c0_21] : memref<1x4x8x32xbf16, #tpu.memory_space<vmem>>, vector<1x1x8x32xbf16>
    %22 = vector.shape_cast %21 : vector<1x1x8x32xbf16> to vector<8x32xbf16>
    %23 = vector.shape_cast %20 : vector<8x32xbf16> to vector<1x1x8x32xbf16>
    tpu.vector_store %arg5[%c0_18, %c1_19, %c0_20, %c0_21], %23 {strides = array<i32>} : memref<1x4x8x32xbf16, #tpu.memory_space<vmem>>, vector<1x1x8x32xbf16>,
    %c2 = arith.constant 2 : index
    %c0_22 = arith.constant 0 : index
    %c0_23 = arith.constant 0 : index
    %24 = vector.load %arg3[%c2, %c0_22, %c0_23] : memref<4x64x32xbf16, #tpu.memory_space<vmem>>, vector<1x64x32xbf16>
    %25 = vector.shape_cast %24 : vector<1x64x32xbf16> to vector<64x32xbf16>
    %cst_24 = arith.constant dense<0.000000e+00> : vector<8x32xf32>
    %26 = tpu.matmul %1, %25, %cst_24 {dimension_numbers = #tpu.dot_dimension_numbers<[1], [0], [0], [1], [0, 0, 1, 1], [], []>} : vector<8x64xbf16>, vector<64x32xbf16>, vector<8x32xf32> -> vector<8x32xf32>
    %c2_25 = arith.constant 2 : index
    %c0_26 = arith.constant 0 : index
    %c0_27 = arith.constant 0 : index
    %27 = vector.load %arg4[%c2_25, %c0_26, %c0_27] : memref<4x1x32xf32, #tpu.memory_space<vmem>>, vector<1x1x32xf32>
    %28 = vector.shape_cast %27 : vector<1x1x32xf32> to vector<1x32xf32>
    %29 = vector.broadcast %28 : vector<1x32xf32> to vector<8x32xf32>
    %30 = arith.addf %26, %29 : vector<8x32xf32>
    %31 = arith.truncf %30 : vector<8x32xf32> to vector<8x32xbf16>
    %c0_28 = arith.constant 0 : index
    %c2_29 = arith.constant 2 : index
    %c0_30 = arith.constant 0 : index
    %c0_31 = arith.constant 0 : index
    %32 = vector.load %arg5[%c0_28, %c2_29, %c0_30, %c0_31] : memref<1x4x8x32xbf16, #tpu.memory_space<vmem>>, vector<1x1x8x32xbf16>
    %33 = vector.shape_cast %32 : vector<1x1x8x32xbf16> to vector<8x32xbf16>
    %34 = vector.shape_cast %31 : vector<8x32xbf16> to vector<1x1x8x32xbf16>
    tpu.vector_store %arg5[%c0_28, %c2_29, %c0_30, %c0_31], %34 {strides = array<i32>} : memref<1x4x8x32xbf16, #tpu.memory_space<vmem>>, vector<1x1x8x32xbf16>,
    %c3 = arith.constant 3 : index
    %c0_32 = arith.constant 0 : index
    %c0_33 = arith.constant 0 : index
    %35 = vector.load %arg3[%c3, %c0_32, %c0_33] : memref<4x64x32xbf16, #tpu.memory_space<vmem>>, vector<1x64x32xbf16>
    %36 = vector.shape_cast %35 : vector<1x64x32xbf16> to vector<64x32xbf16>
    %cst_34 = arith.constant dense<0.000000e+00> : vector<8x32xf32>
    %37 = tpu.matmul %1, %36, %cst_34 {dimension_numbers = #tpu.dot_dimension_numbers<[1], [0], [0], [1], [0, 0, 1, 1], [], []>} : vector<8x64xbf16>, vector<64x32xbf16>, vector<8x32xf32> -> vector<8x32xf32>
    %c3_35 = arith.constant 3 : index
    %c0_36 = arith.constant 0 : index
    %c0_37 = arith.constant 0 : index
    %38 = vector.load %arg4[%c3_35, %c0_36, %c0_37] : memref<4x1x32xf32, #tpu.memory_space<vmem>>, vector<1x1x32xf32>
    %39 = vector.shape_cast %38 : vector<1x1x32xf32> to vector<1x32xf32>
    %40 = vector.broadcast %39 : vector<1x32xf32> to vector<8x32xf32>
    %41 = arith.addf %37, %40 : vector<8x32xf32>
    %42 = arith.truncf %41 : vector<8x32xf32> to vector<8x32xbf16>
    %c0_38 = arith.constant 0 : index
    %c3_39 = arith.constant 3 : index
    %c0_40 = arith.constant 0 : index
    %c0_41 = arith.constant 0 : index
    %43 = vector.load %arg5[%c0_38, %c3_39, %c0_40, %c0_41] : memref<1x4x8x32xbf16, #tpu.memory_space<vmem>>, vector<1x1x8x32xbf16>
    %44 = vector.shape_cast %43 : vector<1x1x8x32xbf16> to vector<8x32xbf16>
    %45 = vector.shape_cast %42 : vector<8x32xbf16> to vector<1x1x8x32xbf16>
    tpu.vector_store %arg5[%c0_38, %c3_39, %c0_40, %c0_41], %45 {strides = array<i32>} : memref<1x4x8x32xbf16, #tpu.memory_space<vmem>>, vector<1x1x8x32xbf16>,
    return
  }
  func.func @transform_0(%arg0: i32, %arg1: i32) -> (i32, i32, i32) {
    %c0_i32 = arith.constant 0 : i32
    %c0_i32_0 = arith.constant 0 : i32
    return %arg0, %arg1, %c0_i32 : i32, i32, i32
  }
  func.func @transform_1(%arg0: i32, %arg1: i32) -> (i32, i32, i32) {
    %c0_i32 = arith.constant 0 : i32
    %c0_i32_0 = arith.constant 0 : i32
    %c0_i32_1 = arith.constant 0 : i32
    %c0_i32_2 = arith.constant 0 : i32
    return %c0_i32, %c0_i32_0, %c0_i32_1 : i32, i32, i32
  }
  func.func @transform_2(%arg0: i32, %arg1: i32) -> (i32, i32, i32) {
    %c0_i32 = arith.constant 0 : i32
    %c0_i32_0 = arith.constant 0 : i32
    %c0_i32_1 = arith.constant 0 : i32
    %c0_i32_2 = arith.constant 0 : i32
    return %c0_i32, %c0_i32_0, %c0_i32_1 : i32, i32, i32
  }
  func.func @transform_3(%arg0: i32, %arg1: i32) -> (i32, i32, i32, i32) {
    %c0_i32 = arith.constant 0 : i32
    %c0_i32_0 = arith.constant 0 : i32
    %c0_i32_1 = arith.constant 0 : i32
    return %arg0, %c0_i32, %arg1, %c0_i32_0 : i32, i32, i32, i32
  }
}

</mosaic_0001>

<llo_original>
// kernel: tpu_custom_call.1
$region0: #{tpu_custom_call.1}
  #allocation0 [shape = 'u32[]', space=smem, size = 0x4, offset = 0x4, fixed_abs, tag = 'smem constant byte address 0x4 - core index']
  #allocation1 [shape = 'u32[144,128]{1,0:T(1,128)}', space=vmem, size = 0x12000, scoped, tag = 'internal scratch']
  %s0 = inlined_call_operand.vmem [shape: bf16[2,8,64], index: 0, kind: input, shape index: {}]
  %s1 = inlined_call_operand.vmem [shape: bf16[4,64,32], index: 1, kind: input, shape index: {}]
  %s2 = inlined_call_operand.vmem [shape: f32[4,1,32], index: 2, kind: input, shape index: {}]
  %s3 = inlined_call_operand.hbm [shape: bf16[2,4,8,32], index: 3, kind: output, shape index: {}]
  %s4 = sld [smem:[#allocation0]]
  $region45: #{tpu_custom_call.1} parent=0
    _
  %s6 = ssub.s32 1, %s4
  %s7 = scalar_select 0, %s6, %s4
  $region1: #{tpu_custom_call.1} parent=0
    #allocation2 [shape = 'u8[16384]{0}', space=vmem, size = 0x4000, scoped, tag = 'output window, operand 0']
    #allocation3 [shape = 's32[2]{0}', space=sflag, size = 0x8, scoped, tag = 'scoped memory for tpu_custom_call.1']
    %8 = vsyncpa [#allocation3], 0
    %s9 = scalar_lea.sflag [#allocation3], 1
    %10 = vsyncpa %s9, 0
    loop: start=0, step=1, limit=4
    $region2: #{tpu_custom_call.1} parent=1 // loop_pre_header
      _
    $region3: #{tpu_custom_call.1} parent=1 // loop_header
      %s12 = sphi 0, %s16
      %p13 = scmp.ge.s32.totalorder %s12, 4
      %s19 = sphi 0, %s31
      %s20 = sphi 0, %s27
      %s21 = sphi 0, %s19
      %s22 = sphi 0, %s20
      %s23 = sphi 0, %s21
      %s24 = sphi 0, %s22
      %s36 = sphi 0, %s38
      %s39 = sphi 0, %s36
      %s40 = sphi 0, %s39
      %s56 = sphi 0, %s40
      %s60 = sphi 0, %s60
      %s62 = sphi 0, %s60
      %s63 = sphi 0, %s62
      %s77 = sphi 0, %s63
      %s81 = sphi 0, %s81
      %s83 = sphi 0, %s81
      %s84 = sphi 0, %s83
      %s98 = sphi 0, %s84
      %s106 = sphi 0, %s108
      %s109 = sphi 0, %s106
      %s110 = sphi 0, %s109
      %s126 = sphi 0, %s110
    $region4: #{tpu_custom_call.1} parent=1 // loop_header_branch
      %15 = sbr.rel (%p13) target = $region8
    $region5: #{tpu_custom_call.1} parent=1 // loop_body
      %s17 = ssub.s32 %s12, 1
      %s18 = ssub.s32 %s12, 2
      %s25 = sadd.s32 1, %s20
      %p26 = scmp.ge.s32.totalorder %s25, 1
      %s27 = scalar_select %p26, 0, %s25
      %s28 = sadd.s32 1, %s19
      %s29 = scalar_select %p26, %s28, %s19
      %p30 = scmp.ge.s32.totalorder %s29, 2
      %s31 = scalar_select %p30, 0, %s29
      %s32 = ssub.s32 %s19, %s31
      %s33 = ssub.s32 %s20, %s27
      %s34 = sor.u32 %s32, %s33
      %p35 = scmp.eq.s32.totalorder %s34, 0
      %s37 = sadd.s32 %s36, 1
      %s38 = scalar_select %p35, %s36, %s37
      %p41 = pneg %p35
      %p42 = scmp.eq.s32.totalorder %s12, 1
      %p43 = por %p41, %p42
      %p44 = scmp.ne.s32.totalorder %s36, %s39
      %p45 = scmp.eq.s32.totalorder %s12, 0
      %p46 = por %p44, %p45
      %p47 = scmp.ne.s32.totalorder %s36, %s39
      %p48 = scmp.eq.s32.totalorder %s17, 1
      %p49 = por %p47, %p48
      %p50 = scmp.ne.s32.totalorder %s39, %s40
      %p51 = scmp.eq.s32.totalorder %s17, 0
      %p52 = por %p50, %p51
      %p53 = scmp.ne.s32.totalorder %s39, %s40
      %p54 = scmp.eq.s32.totalorder %s18, 1
      %p55 = por %p53, %p54
      %p57 = scmp.ne.s32.totalorder %s40, %s56
      %p58 = scmp.eq.s32.totalorder %s18, 0
      %p59 = por %p57, %p58
      %s61 = sadd.s32 %s60, 1
      %p64 = scmp.eq.s32.totalorder %s12, 1
      %p65 = scmp.ne.s32.totalorder %s60, %s62
      %p66 = scmp.eq.s32.totalorder %s12, 0
      %p67 = por %p65, %p66
      %p68 = scmp.ne.s32.totalorder %s60, %s62
      %p69 = scmp.eq.s32.totalorder %s17, 1
      %p70 = por %p68, %p69
      %p71 = scmp.ne.s32.totalorder %s62, %s63
      %p72 = scmp.eq.s32.totalorder %s17, 0
      %p73 = por %p71, %p72
      %p74 = scmp.ne.s32.totalorder %s62, %s63
      %p75 = scmp.eq.s32.totalorder %s18, 1
      %p76 = por %p74, %p75
      %p78 = scmp.ne.s32.totalorder %s63, %s77
      %p79 = scmp.eq.s32.totalorder %s18, 0
      %p80 = por %p78, %p79
      %s82 = sadd.s32 %s81, 1
      %p85 = scmp.eq.s32.totalorder %s12, 1
      %p86 = scmp.ne.s32.totalorder %s81, %s83
      %p87 = scmp.eq.s32.totalorder %s12, 0
      %p88 = por %p86, %p87
      %p89 = scmp.ne.s32.totalorder %s81, %s83
      %p90 = scmp.eq.s32.totalorder %s17, 1
      %p91 = por %p89, %p90
      %p92 = scmp.ne.s32.totalorder %s83, %s84
      %p93 = scmp.eq.s32.totalorder %s17, 0
      %p94 = por %p92, %p93
      %p95 = scmp.ne.s32.totalorder %s83, %s84
      %p96 = scmp.eq.s32.totalorder %s18, 1
      %p97 = por %p95, %p96
      %p99 = scmp.ne.s32.totalorder %s84, %s98
      %p100 = scmp.eq.s32.totalorder %s18, 0
      %p101 = por %p99, %p100
      %s102 = ssub.s32 %s19, %s31
      %s103 = ssub.s32 %s20, %s27
      %s104 = sor.u32 %s102, %s103
      %p105 = scmp.eq.s32.totalorder %s104, 0
      %s107 = sadd.s32 %s106, 1
      %s108 = scalar_select %p105, %s106, %s107
      %p111 = pneg %p105
      %p112 = scmp.eq.s32.totalorder %s12, 1
      %p113 = por %p111, %p112
      %p114 = scmp.ne.s32.totalorder %s106, %s109
      %p115 = scmp.eq.s32.totalorder %s12, 0
      %p116 = por %p114, %p115
      %p117 = scmp.ne.s32.totalorder %s106, %s109
      %p118 = scmp.eq.s32.totalorder %s17, 1
      %p119 = por %p117, %p118
      %p120 = scmp.ne.s32.totalorder %s109, %s110
      %p121 = scmp.eq.s32.totalorder %s17, 0
      %p122 = por %p120, %p121
      %p123 = scmp.ne.s32.totalorder %s109, %s110
      %p124 = scmp.eq.s32.totalorder %s18, 1
      %p125 = por %p123, %p124
      %p127 = scmp.ne.s32.totalorder %s110, %s126
      %p128 = scmp.eq.s32.totalorder %s18, 0
      %p129 = por %p127, %p128
      %p130 = scmp.le.s32.totalorder 1, %s12
      %p131 = scmp.lt.s32.totalorder %s12, 3
      %p132 = pnand %p130, %p131
      %p133 = pneg %p132
      // Predicated region
      $region9: #{tpu_custom_call.1} parent=5 // pred_check
        _
      $region10: #{tpu_custom_call.1} parent=5 // pred_check_branch
        %135 = sbr.rel (%p132) target = $region12
      $region11: #{tpu_custom_call.1} parent=5 // pred_region
        %s136 = ssub.s32 %s12, 1
        // Predicated region
        $region13: #{tpu_custom_call.1} parent=11 // pred_check
          %p137 = pneg %p73
        $region14: #{tpu_custom_call.1} parent=11 // pred_check_branch
          %139 = sbr.rel (%p137) target = $region16
        $region15: #{tpu_custom_call.1} parent=11 // pred_region
          _
        $region16: #{tpu_custom_call.1} parent=11 // pred_fallthru
          _
        // Predicated region
        $region17: #{tpu_custom_call.1} parent=11 // pred_check
          %p140 = pneg %p94
        $region18: #{tpu_custom_call.1} parent=11 // pred_check_branch
          %142 = sbr.rel (%p140) target = $region20
        $region19: #{tpu_custom_call.1} parent=11 // pred_region
          _
        $region20: #{tpu_custom_call.1} parent=11 // pred_fallthru
          _
      $region12: #{tpu_custom_call.1} parent=5 // pred_fallthru
        _
      %p143 = scmp.lt.s32.totalorder %s12, 2
      // Predicated region
      $region21: #{tpu_custom_call.1} parent=5 // pred_check
        %p144 = pneg %p143
      $region22: #{tpu_custom_call.1} parent=5 // pred_check_branch
        %146 = sbr.rel (%p144) target = $region24
      $region23: #{tpu_custom_call.1} parent=5 // pred_region
        // Predicated region
        $region25: #{tpu_custom_call.1} parent=23 // pred_check
          %p147 = pneg %p46
        $region26: #{tpu_custom_call.1} parent=23 // pred_check_branch
          %149 = sbr.rel (%p147) target = $region28
        $region27: #{tpu_custom_call.1} parent=23 // pred_region
          %p150 = scmp.lt.s32.totalorder %s19, 1
          %s151 = scalar_select %p150, %s19, 1
          %p152 = scmp.lt.s32.totalorder %s20, 0
          %s153 = scalar_select %p152, %s20, 0
          %s154 = sadd.s32 %s153, %s151
          %s155 = smul.addr %s154, 4
          %s156 = scalar_lea.vmem %s0, %s155
        $region28: #{tpu_custom_call.1} parent=23 // pred_fallthru
          _
      $region24: #{tpu_custom_call.1} parent=5 // pred_fallthru
        _
      %p157 = scmp.le.s32.totalorder 1, %s12
      %p158 = scmp.lt.s32.totalorder %s12, 3
      %p159 = pnand %p157, %p158
      %p160 = pneg %p159
      // Predicated region
      $region29: #{tpu_custom_call.1} parent=5 // pred_check
        _
      $region30: #{tpu_custom_call.1} parent=5 // pred_check_branch
        %162 = sbr.rel (%p159) target = $region32
      $region31: #{tpu_custom_call.1} parent=5 // pred_region
        %s163 = ssub.s32 %s12, 1
        %p164 = scmp.lt.s32.totalorder %s21, 1
        %s165 = scalar_select %p164, %s21, 1
        %p166 = scmp.lt.s32.totalorder %s22, 0
        %s167 = scalar_select %p166, %s22, 0
        %s168 = sadd.s32 %s167, %s165
        %s169 = smul.addr %s168, 4
        %s170 = scalar_lea.vmem %s0, %s169
        %p171 = pneg %p52
        %p172 = pneg %p49
        %p173 = pneg %p73
        %p174 = pneg %p70
        %p175 = pneg %p94
        %p176 = pneg %p91
        %p177 = pneg %p122
        %p178 = pneg %p119
        %s179 = sand.u32 %s109, 1
        %s180 = scalar_lea.sflag [#allocation3], %s179
        %s181 = sand.u32 %s109, 1
        %s182 = smul.addr %s181, 16
        %s183 = scalar_lea.vmem [#allocation2], %s182
        %p184 = scmp.lt.s32.totalorder %s21, 1
        %s185 = scalar_select %p184, %s21, 1
        %p186 = scmp.lt.s32.totalorder %s22, 0
        %s187 = scalar_select %p186, %s22, 0
        %s188 = sadd.s32 %s187, %s185
        %s189 = smul.addr %s188, 4
        %s190 = scalar_lea.vmem %s0, %s189
        %v192 = vld [vmem:[%s190] sm:$0xf]
        %v193 = vld [vmem:[%s1] sm:$0xf]
        %v194 = vld [vmem:[%s1 + $0x4] sm:$0xf]
        %v195 = vld [vmem:[%s1 + $0x8] sm:$0xf]
        %v196 = vld [vmem:[%s1 + $0xc] sm:$0xf]
        %v197 = vld [vmem:[%s1 + $0x10] sm:$0xf]
        %v198 = vld [vmem:[%s1 + $0x14] sm:$0xf]
        %v199 = vld [vmem:[%s1 + $0x18] sm:$0xf]
        %v200 = vld [vmem:[%s1 + $0x1c] sm:$0xf]
        %v201 = vld [vmem:[%s2] sm:$0x1]
        %v203 = vlaneseq
        %v204 = vshrl.u32 %v203, 7
        %v205 = vsub.s32 0, %v204
        %v206 = vrot.slane %v201, %v205
        %v216 = vunpack.c.l.b16 %v193
        %v217 = vunpack.c.l.b16 %v194
        %v218 = vunpack.c.l.b16 %v195
        %v219 = vunpack.c.l.b16 %v196
        %v220 = vunpack.c.l.b16 %v197
        %v221 = vunpack.c.l.b16 %v198
        %v222 = vunpack.c.l.b16 %v199
        %v223 = vunpack.c.l.b16 %v200
        %v224 = vpack.c.b16 %v217, %v216
        %v225 = vpack.c.b16 %v219, %v218
        %v226 = vpack.c.b16 %v221, %v220
        %v227 = vpack.c.b16 %v223, %v222
        %vm232 = vcmask 523264
        %v234 = vsel %vm232, %v192, 0
        %236 = vmatprep.subr.bf16.mxu0 0
        %237 = vmatpush1.bf16.msra.mxu0 %v224
        %238 = vmatprep.subr.bf16.mxu0 0
        %239 = vmatpush1.bf16.msra.mxu0 %v225
        %240 = vmatprep.subr.bf16.mxu0 0
        %241 = vmatpush1.bf16.msra.mxu0 %v226
        %242 = vmatprep.subr.bf16.mxu0 0
        %243 = vmatpush1.bf16.msra.mxu0 %v227
        %244 = vmatprep.subr.bf16.mxu0 0
        %245 = vmatpush1.bf16.msra.mxu0 0
        %246 = vmatprep.subr.bf16.mxu0 0
        %247 = vmatpush1.bf16.msra.mxu0 0
        %248 = vmatprep.subr.bf16.mxu0 0
        %249 = vmatpush1.bf16.msra.mxu0 0
        %250 = vmatprep.subr.bf16.mxu0 0
        %251 = vmatpush1.bf16.msra.mxu0 0
        %252 = vmatprep.subr.bf16.mxu0 0
        %253 = vmatpush1.bf16.msra.mxu0 0
        %254 = vmatprep.subr.bf16.mxu0 0
        %255 = vmatpush1.bf16.msra.mxu0 0
        %256 = vmatprep.subr.bf16.mxu0 0
        %257 = vmatpush1.bf16.msra.mxu0 0
        %258 = vmatprep.subr.bf16.mxu0 0
        %259 = vmatpush1.bf16.msra.mxu0 0
        %260 = vmatprep.subr.bf16.mxu0 0
        %261 = vmatpush1.bf16.msra.mxu0 0
        %262 = vmatprep.subr.bf16.mxu0 0
        %263 = vmatpush1.bf16.msra.mxu0 0
        %264 = vmatprep.subr.bf16.mxu0 0
        %265 = vmatpush1.bf16.msra.mxu0 0
        %266 = vmatprep.subr.bf16.mxu0 0
        %267 = vmatpush1.bf16.msra.mxu0 0
        %268 = vmatprep.mubr.bf16.mxu0 0
        %269 = vmatmul.mubr.bf16.gmra.mrb[0].mxu0 %v234
        %v270 = vpop.f32.mrb[0].mxu0
        %v271 = vadd.f32 %v206, %v270
        %v272 = vpop.f32.mrb[0].mxu0
        %v273 = vpop.f32.mrb[0].mxu0
        %v274 = vpop.f32.mrb[0].mxu0
        %275 = vdwg.mxu0
        %v276 = vpack.c.bf16 %v271, %v271
        %vm277 = vcmask 257024
        %278 = vst.msk [vmem:[%s183] sm:$0xf] %vm277, %v276
        %s279 = scalar_lea.vmem %s1, 32
        %v280 = vld [vmem:[%s279] sm:$0xf]
        %v281 = vld [vmem:[%s279 + $0x4] sm:$0xf]
        %v282 = vld [vmem:[%s279 + $0x8] sm:$0xf]
        %v283 = vld [vmem:[%s279 + $0xc] sm:$0xf]
        %v284 = vld [vmem:[%s279 + $0x10] sm:$0xf]
        %v285 = vld [vmem:[%s279 + $0x14] sm:$0xf]
        %v286 = vld [vmem:[%s279 + $0x18] sm:$0xf]
        %v287 = vld [vmem:[%s279 + $0x1c] sm:$0xf]
        %s288 = scalar_lea.vmem %s2, 1
        %v289 = vld [vmem:[%s288] sm:$0x1]
        %v291 = vlaneseq
        %v292 = vshrl.u32 %v291, 7
        %v293 = vsub.s32 0, %v292
        %v294 = vrot.slane %v289, %v293
        %v304 = vunpack.c.l.b16 %v280
        %v305 = vunpack.c.l.b16 %v281
        %v306 = vunpack.c.l.b16 %v282
        %v307 = vunpack.c.l.b16 %v283
        %v308 = vunpack.c.l.b16 %v284
        %v309 = vunpack.c.l.b16 %v285
        %v310 = vunpack.c.l.b16 %v286
        %v311 = vunpack.c.l.b16 %v287
        %v312 = vpack.c.b16 %v305, %v304
        %v313 = vpack.c.b16 %v307, %v306
        %v314 = vpack.c.b16 %v309, %v308
        %v315 = vpack.c.b16 %v311, %v310
        %320 = vmatprep.subr.bf16.mxu0 0
        %321 = vmatpush1.bf16.msra.mxu0 %v312
        %322 = vmatprep.subr.bf16.mxu0 0
        %323 = vmatpush1.bf16.msra.mxu0 %v313
        %324 = vmatprep.subr.bf16.mxu0 0
        %325 = vmatpush1.bf16.msra.mxu0 %v314
        %326 = vmatprep.subr.bf16.mxu0 0
        %327 = vmatpush1.bf16.msra.mxu0 %v315
        %328 = vmatprep.subr.bf16.mxu0 0
        %329 = vmatpush1.bf16.msra.mxu0 0
        %330 = vmatprep.subr.bf16.mxu0 0
        %331 = vmatpush1.bf16.msra.mxu0 0
        %332 = vmatprep.subr.bf16.mxu0 0
        %333 = vmatpush1.bf16.msra.mxu0 0
        %334 = vmatprep.subr.bf16.mxu0 0
        %335 = vmatpush1.bf16.msra.mxu0 0
        %336 = vmatprep.subr.bf16.mxu0 0
        %337 = vmatpush1.bf16.msra.mxu0 0
        %338 = vmatprep.subr.bf16.mxu0 0
        %339 = vmatpush1.bf16.msra.mxu0 0
        %340 = vmatprep.subr.bf16.mxu0 0
        %341 = vmatpush1.bf16.msra.mxu0 0
        %342 = vmatprep.subr.bf16.mxu0 0
        %343 = vmatpush1.bf16.msra.mxu0 0
        %344 = vmatprep.subr.bf16.mxu0 0
        %345 = vmatpush1.bf16.msra.mxu0 0
        %346 = vmatprep.subr.bf16.mxu0 0
        %347 = vmatpush1.bf16.msra.mxu0 0
        %348 = vmatprep.subr.bf16.mxu0 0
        %349 = vmatpush1.bf16.msra.mxu0 0
        %350 = vmatprep.subr.bf16.mxu0 0
        %351 = vmatpush1.bf16.msra.mxu0 0
        %352 = vmatprep.mubr.bf16.mxu0 0
        %353 = vmatmul.mubr.bf16.gmra.mrb[0].mxu0 %v234
        %v354 = vpop.f32.mrb[0].mxu0
        %v355 = vadd.f32 %v294, %v354
        %v356 = vpop.f32.mrb[0].mxu0
        %v357 = vpop.f32.mrb[0].mxu0
        %v358 = vpop.f32.mrb[0].mxu0
        %359 = vdwg.mxu0
        %v360 = vpack.c.bf16 %v355, %v355
        %s361 = scalar_lea.vmem %s183, 4 [#allocation2]
        %362 = vst.msk [vmem:[%s361] sm:$0xf] %vm277, %v360
        %s363 = scalar_lea.vmem %s1, 64
        %v364 = vld [vmem:[%s363] sm:$0xf]
        %v365 = vld [vmem:[%s363 + $0x4] sm:$0xf]
        %v366 = vld [vmem:[%s363 + $0x8] sm:$0xf]
        %v367 = vld [vmem:[%s363 + $0xc] sm:$0xf]
        %v368 = vld [vmem:[%s363 + $0x10] sm:$0xf]
        %v369 = vld [vmem:[%s363 + $0x14] sm:$0xf]
        %v370 = vld [vmem:[%s363 + $0x18] sm:$0xf]
        %v371 = vld [vmem:[%s363 + $0x1c] sm:$0xf]
        %s372 = scalar_lea.vmem %s2, 2
        %v373 = vld [vmem:[%s372] sm:$0x1]
        %v375 = vlaneseq
        %v376 = vshrl.u32 %v375, 7
        %v377 = vsub.s32 0, %v376
        %v378 = vrot.slane %v373, %v377
        %v388 = vunpack.c.l.b16 %v364
        %v389 = vunpack.c.l.b16 %v365
        %v390 = vunpack.c.l.b16 %v366
        %v391 = vunpack.c.l.b16 %v367
        %v392 = vunpack.c.l.b16 %v368
        %v393 = vunpack.c.l.b16 %v369
        %v394 = vunpack.c.l.b16 %v370
        %v395 = vunpack.c.l.b16 %v371
        %v396 = vpack.c.b16 %v389, %v388
        %v397 = vpack.c.b16 %v391, %v390
        %v398 = vpack.c.b16 %v393, %v392
        %v399 = vpack.c.b16 %v395, %v394
        %404 = vmatprep.subr.bf16.mxu0 0
        %405 = vmatpush1.bf16.msra.mxu0 %v396
        %406 = vmatprep.subr.bf16.mxu0 0
        %407 = vmatpush1.bf16.msra.mxu0 %v397
        %408 = vmatprep.subr.bf16.mxu0 0
        %409 = vmatpush1.bf16.msra.mxu0 %v398
        %410 = vmatprep.subr.bf16.mxu0 0
        %411 = vmatpush1.bf16.msra.mxu0 %v399
        %412 = vmatprep.subr.bf16.mxu0 0
        %413 = vmatpush1.bf16.msra.mxu0 0
        %414 = vmatprep.subr.bf16.mxu0 0
        %415 = vmatpush1.bf16.msra.mxu0 0
        %416 = vmatprep.subr.bf16.mxu0 0
        %417 = vmatpush1.bf16.msra.mxu0 0
        %418 = vmatprep.subr.bf16.mxu0 0
        %419 = vmatpush1.bf16.msra.mxu0 0
        %420 = vmatprep.subr.bf16.mxu0 0
        %421 = vmatpush1.bf16.msra.mxu0 0
        %422 = vmatprep.subr.bf16.mxu0 0
        %423 = vmatpush1.bf16.msra.mxu0 0
        %424 = vmatprep.subr.bf16.mxu0 0
        %425 = vmatpush1.bf16.msra.mxu0 0
        %426 = vmatprep.subr.bf16.mxu0 0
        %427 = vmatpush1.bf16.msra.mxu0 0
        %428 = vmatprep.subr.bf16.mxu0 0
        %429 = vmatpush1.bf16.msra.mxu0 0
        %430 = vmatprep.subr.bf16.mxu0 0
        %431 = vmatpush1.bf16.msra.mxu0 0
        %432 = vmatprep.subr.bf16.mxu0 0
        %433 = vmatpush1.bf16.msra.mxu0 0
        %434 = vmatprep.subr.bf16.mxu0 0
        %435 = vmatpush1.bf16.msra.mxu0 0
        %436 = vmatprep.mubr.bf16.mxu0 0
        %437 = vmatmul.mubr.bf16.gmra.mrb[0].mxu0 %v234
        %v438 = vpop.f32.mrb[0].mxu0
        %v439 = vadd.f32 %v378, %v438
        %v440 = vpop.f32.mrb[0].mxu0
        %v441 = vpop.f32.mrb[0].mxu0
        %v442 = vpop.f32.mrb[0].mxu0
        %443 = vdwg.mxu0
        %v444 = vpack.c.bf16 %v439, %v439
        %s445 = scalar_lea.vmem %s183, 8 [#allocation2]
        %446 = vst.msk [vmem:[%s445] sm:$0xf] %vm277, %v444
        %s447 = scalar_lea.vmem %s1, 96
        %v448 = vld [vmem:[%s447] sm:$0xf]
        %v449 = vld [vmem:[%s447 + $0x4] sm:$0xf]
        %v450 = vld [vmem:[%s447 + $0x8] sm:$0xf]
        %v451 = vld [vmem:[%s447 + $0xc] sm:$0xf]
        %v452 = vld [vmem:[%s447 + $0x10] sm:$0xf]
        %v453 = vld [vmem:[%s447 + $0x14] sm:$0xf]
        %v454 = vld [vmem:[%s447 + $0x18] sm:$0xf]
        %v455 = vld [vmem:[%s447 + $0x1c] sm:$0xf]
        %s456 = scalar_lea.vmem %s2, 3
        %v457 = vld [vmem:[%s456] sm:$0x1]
        %v459 = vlaneseq
        %v460 = vshrl.u32 %v459, 7
        %v461 = vsub.s32 0, %v460
        %v462 = vrot.slane %v457, %v461
        %v472 = vunpack.c.l.b16 %v448
        %v473 = vunpack.c.l.b16 %v449
        %v474 = vunpack.c.l.b16 %v450
        %v475 = vunpack.c.l.b16 %v451
        %v476 = vunpack.c.l.b16 %v452
        %v477 = vunpack.c.l.b16 %v453
        %v478 = vunpack.c.l.b16 %v454
        %v479 = vunpack.c.l.b16 %v455
        %v480 = vpack.c.b16 %v473, %v472
        %v481 = vpack.c.b16 %v475, %v474
        %v482 = vpack.c.b16 %v477, %v476
        %v483 = vpack.c.b16 %v479, %v478
        %488 = vmatprep.subr.bf16.mxu0 0
        %489 = vmatpush1.bf16.msra.mxu0 %v480
        %490 = vmatprep.subr.bf16.mxu0 0
        %491 = vmatpush1.bf16.msra.mxu0 %v481
        %492 = vmatprep.subr.bf16.mxu0 0
        %493 = vmatpush1.bf16.msra.mxu0 %v482
        %494 = vmatprep.subr.bf16.mxu0 0
        %495 = vmatpush1.bf16.msra.mxu0 %v483
        %496 = vmatprep.subr.bf16.mxu0 0
        %497 = vmatpush1.bf16.msra.mxu0 0
        %498 = vmatprep.subr.bf16.mxu0 0
        %499 = vmatpush1.bf16.msra.mxu0 0
        %500 = vmatprep.subr.bf16.mxu0 0
        %501 = vmatpush1.bf16.msra.mxu0 0
        %502 = vmatprep.subr.bf16.mxu0 0
        %503 = vmatpush1.bf16.msra.mxu0 0
        %504 = vmatprep.subr.bf16.mxu0 0
        %505 = vmatpush1.bf16.msra.mxu0 0
        %506 = vmatprep.subr.bf16.mxu0 0
        %507 = vmatpush1.bf16.msra.mxu0 0
        %508 = vmatprep.subr.bf16.mxu0 0
        %509 = vmatpush1.bf16.msra.mxu0 0
        %510 = vmatprep.subr.bf16.mxu0 0
        %511 = vmatpush1.bf16.msra.mxu0 0
        %512 = vmatprep.subr.bf16.mxu0 0
        %513 = vmatpush1.bf16.msra.mxu0 0
        %514 = vmatprep.subr.bf16.mxu0 0
        %515 = vmatpush1.bf16.msra.mxu0 0
        %516 = vmatprep.subr.bf16.mxu0 0
        %517 = vmatpush1.bf16.msra.mxu0 0
        %518 = vmatprep.subr.bf16.mxu0 0
        %519 = vmatpush1.bf16.msra.mxu0 0
        %520 = vmatprep.mubr.bf16.mxu0 0
        %521 = vmatmul.mubr.bf16.gmra.mrb[0].mxu0 %v234
        %v522 = vpop.f32.mrb[0].mxu0
        %v523 = vadd.f32 %v462, %v522
        %v524 = vpop.f32.mrb[0].mxu0
        %v525 = vpop.f32.mrb[0].mxu0
        %v526 = vpop.f32.mrb[0].mxu0
        %527 = vdwg.mxu0
        %v528 = vpack.c.bf16 %v523, %v523
        %s529 = scalar_lea.vmem %s183, 12 [#allocation2]
        %530 = vst.msk [vmem:[%s529] sm:$0xf] %vm277, %v528
        %s531 = sand.u32 %s109, 1
        %s532 = scalar_lea.sflag [#allocation3], %s531
        %s533 = sand.u32 %s109, 1
        %s534 = smul.addr %s533, 16
        %s535 = scalar_lea.vmem [#allocation2], %s534
        // Predicated region
        $region33: #{tpu_custom_call.1} parent=31 // pred_check
          %p536 = pneg %p119
        $region34: #{tpu_custom_call.1} parent=31 // pred_check_branch
          %538 = sbr.rel (%p536) target = $region36
        $region35: #{tpu_custom_call.1} parent=31 // pred_region
          %s540 = ssub.s32 256, 256
          %541 = vsyncadd %s532, %s540
          %s542 = smul.addr %s21, 4
          %s543 = sadd.s32 %s22, %s542
          %s544 = smul.addr %s543, 64
          %s545 = scalar_lea.hbm %s3, %s544
          %s546 = sshll.u32 %s535, 4
          %s547 = int_to_ptr.vmem [resolvable:$true] %s546
          %552 = dma.vmem_to_hbm [thread:$0]  %s547, 256, %s545, %s532, 64, 64, 4
        $region36: #{tpu_custom_call.1} parent=31 // pred_fallthru
          _
      $region32: #{tpu_custom_call.1} parent=5 // pred_fallthru
        _
      %p553 = scmp.le.s32.totalorder 2, %s12
      // Predicated region
      $region37: #{tpu_custom_call.1} parent=5 // pred_check
        %p554 = pneg %p553
      $region38: #{tpu_custom_call.1} parent=5 // pred_check_branch
        %556 = sbr.rel (%p554) target = $region40
      $region39: #{tpu_custom_call.1} parent=5 // pred_region
        %s557 = ssub.s32 %s12, 2
        // Predicated region
        $region41: #{tpu_custom_call.1} parent=39 // pred_check
          %p558 = pneg %p125
        $region42: #{tpu_custom_call.1} parent=39 // pred_check_branch
          %560 = sbr.rel (%p558) target = $region44
        $region43: #{tpu_custom_call.1} parent=39 // pred_region
          %s561 = sand.u32 %s110, 1
          %s562 = scalar_lea.sflag [#allocation3], %s561
          %s563 = sand.u32 %s110, 1
          %s564 = smul.addr %s563, 16
          %s565 = scalar_lea.vmem [#allocation2], %s564
          %566 = dma.done %s562, 256
        $region44: #{tpu_custom_call.1} parent=39 // pred_fallthru
          _
      $region40: #{tpu_custom_call.1} parent=5 // pred_fallthru
        _
    $region6: #{tpu_custom_call.1} parent=1 // loop_footer
      %s16 = sadd.s32 1, %s12
    $region7: #{tpu_custom_call.1} parent=1 // loop_footer_branch
      %11 = sbr.rel target = $region3
    $region8: #{tpu_custom_call.1} parent=1 // loop_exit
      _
    %567 = vsyncpa [#allocation3], 1
    %s568 = scalar_lea.sflag [#allocation3], 1
    %569 = vsyncpa %s568, 1

</llo_original>
